<compile_context>
chip_gen: v5e
topology: v5e:2x2
jax: 0.10.0
libtpu: 0.0.40
codegen_flags: <defaults>
</compile_context>

<pallas_src>
import math
from functools import partial

import jax
import jax.numpy as jnp
from jax.experimental import pallas as pl
from jax.experimental.pallas import tpu as pltpu


MATMUL_DTYPE = jnp.bfloat16   # MXU input dtype (accumulation stays f32)


# ----------------------------- Pallas kernel ------------------------------ #

def tcn_ae_kernel(L, x_ref,
                  w1, b1, w2, b2, wb, bb,
                  wd1, bd1, wd2, bd2, wd3, bd3,
                  o_ref):
    R, _ = x_ref.shape                       # R = (sequences per block) * L
    x = x_ref[...].astype(jnp.float32)

    # Rows whose l-1 / l+1 neighbour belongs to the same sequence.  The
    # shifted taps of the "same"-padded k=3 convs are zeroed on the other
    # rows, so packed sequences never leak into each other (this also masks
    # the wrap-around rows produced by the rolls).
    row = jax.lax.broadcasted_iota(jnp.int32, (R, 1), 0)
    not_start = (row % L) != 0
    not_end = (row % L) != (L - 1)

    def conv3(h, w_ref, b_ref):
        # h: (R, Cin) f32.  w_ref: (3, Cin, Cout) bf16, taps [l-1, l, l+1].
        # Shifts via XLU roll (no misaligned concat/slice copies); masks in
        # f32; MXU operands in bf16 with f32 accumulation.
        dt = w_ref.dtype
        hm1 = jnp.where(not_start, pltpu.roll(h, shift=1, axis=0), 0.0)
        hp1 = jnp.where(not_end, pltpu.roll(h, shift=R - 1, axis=0), 0.0)
        acc = jnp.dot(hm1.astype(dt), w_ref[0],
                      preferred_element_type=jnp.float32)
        acc = acc + jnp.dot(h.astype(dt), w_ref[1],
                            preferred_element_type=jnp.float32)
        acc = acc + jnp.dot(hp1.astype(dt), w_ref[2],
                            preferred_element_type=jnp.float32)
        return acc + b_ref[...]

    def mm(h, w_ref, b_ref):                 # 1x1 conv
        return jnp.dot(h.astype(w_ref.dtype), w_ref[...],
                       preferred_element_type=jnp.float32) + b_ref[...]

    # encoder
    h = jnp.maximum(conv3(x, w1, b1), 0.0)   # conv1 + relu
    h = jnp.maximum(conv3(h, w2, b2), 0.0)   # conv2 + relu
    enc = mm(h, wb, bb)                      # bottleneck (1x1)

    # decoder
    h = jnp.maximum(mm(enc, wd1, bd1), 0.0)  # deconv1 (1x1) + relu
    h = jnp.maximum(conv3(h, wd2, bd2), 0.0) # deconv2 + relu
    out = conv3(h, wd3, bd3)                 # deconv3

    o_ref[...] = out.astype(o_ref.dtype)


# --------------------- hardware-aware tiling helpers ----------------------- #

def _vmem_capacity_bytes():
    """Per-TensorCore VMEM capacity; conservative fallback if unqueryable."""
    try:
        info = pltpu.get_tpu_info()
        cap = int(getattr(info, "vmem_capacity_bytes", 0) or 0)
        if cap > 0:
            return cap
    except Exception:
        pass
    return 64 * 1024 * 1024      # v7x per-TC size: safe everywhere


def _num_tensorcores():
    """TensorCores sharing the grid (megacore / v7x = 2, v5e/v6e = 1)."""
    try:
        dev = jax.devices()[0]
        n = getattr(dev, "num_cores", None)
        if isinstance(n, int) and 1 <= n <= 8:
            return n
        kind = str(getattr(dev, "device_kind", "")).lower()
        if any(tag in kind for tag in ("v4", "v5p", "v7")):
            return 2
    except Exception:
        pass
    return 1


def _padded_vmem_bytes(p):
    """VMEM bytes of a small weight/bias array incl. lane/sublane padding."""
    s = p.shape
    lanes = ((s[-1] + 127) // 128) * 128
    sub = ((s[-2] + 7) // 8) * 8 if p.ndim >= 2 else 8
    lead = 1
    for d in s[:-2]:
        lead *= int(d)
    return lead * sub * lanes * p.dtype.itemsize


def _choose_tiling(B, L, F, channels, num_cores, vmem_budget):
    """Sequences per grid step + number of blocks.

    Single-TC chips (v5e/v6e): as many sequences per step as the VMEM budget
    allows (ideally the whole batch, one grid step).  2-TC chips (v7x /
    megacore): at least one block per core and an even number of blocks.
    The byte model includes 128-lane padding (every trailing dim < 128 still
    occupies 128 lanes in VMEM) and the live f32/bf16 intermediates.
    """
    pad128 = lambda n: ((max(int(n), 1) + 127) // 128) * 128
    cmax = max([F] + list(channels))
    bytes_per_seq = L * (
        2 * 2 * 4 * pad128(F)       # in + out blocks, double-buffered, f32
        + 4 * 4 * pad128(cmax)      # ~4 live f32 rows (acts, rolled copies, acc)
        + 3 * 2 * pad128(cmax))     # bf16 MXU operands
    tb = max(1, min(B, vmem_budget // max(bytes_per_seq, 1)))
    if num_cores >= 2 and B >= num_cores:
        tb = min(tb, pl.cdiv(B, num_cores))        # >= 1 block per core
    step = 8 // math.gcd(L, 8)                     # keep row blocks 8-sublane aligned
    tb = max(step, (tb // step) * step)
    num_blocks = pl.cdiv(B, tb)
    if num_cores >= 2:                             # balanced megacore schedule
        num_blocks = pl.cdiv(num_blocks, num_cores) * num_cores
    return tb, num_blocks


# ------------------------------- wrapper ----------------------------------- #

def tcn_autoencoder_forward(x, kernel_params):
    """x: (B, L, F) float32; kernel_params: tuple of kernel-layout weights."""
    B, L, F = x.shape
    C0 = kernel_params[0].shape[-1]
    C1 = kernel_params[2].shape[-1]
    Cb = kernel_params[4].shape[-1]

    num_cores = _num_tensorcores()
    vmem_cap = _vmem_capacity_bytes()
    vmem_limit = min(int(0.75 * vmem_cap), 100 * 1024 * 1024)

    weight_vmem = 2 * sum(_padded_vmem_bytes(p) for p in kernel_params)
    tile_budget = max(vmem_limit - weight_vmem - (4 << 20), 1 << 20)

    tb, num_blocks = _choose_tiling(B, L, F, (C0, C1, Cb), num_cores, tile_budget)
    Bp = num_blocks * tb

    # Flatten batch+time into dense sublane rows (free, contiguous reshape);
    # the kernel then needs no in-kernel reshape at all.
    rows, rows_p = B * L, Bp * L
    xf = x.reshape(rows, F)
    if rows_p != rows:                               # pad batch to a tile multiple
        xf = jnp.concatenate(
            [xf, jnp.zeros((rows_p - rows, F), xf.dtype)], axis=0)

    tile_rows = tb * L
    in_specs = [pl.BlockSpec((tile_rows, F), lambda i: (i, 0))]
    for p in kernel_params:
        # tiny full-array weight blocks with a constant block index
        in_specs.append(pl.BlockSpec(p.shape, lambda i, n=p.ndim: (0,) * n))
    out_spec = pl.BlockSpec((tile_rows, F), lambda i: (i, 0))

    flops_per_row = 2 * (3 * F * C0 + 3 * C0 * C1 + C1 * Cb
                         + Cb * C1 + 3 * C1 * C0 + 3 * C0 * F)
    raw_weight_bytes = sum(int(p.size) * p.dtype.itemsize for p in kernel_params)
    cost = pl.CostEstimate(
        flops=int(rows_p * flops_per_row),
        transcendentals=0,
        bytes_accessed=int(2 * rows_p * F * 4 + raw_weight_bytes))

    out = pl.pallas_call(
        partial(tcn_ae_kernel, L),
        out_shape=jax.ShapeDtypeStruct((rows_p, F), jnp.float32),
        grid_spec=pltpu.PrefetchScalarGridSpec(
            num_scalar_prefetch=0,
            grid=(num_blocks,),
            in_specs=in_specs,
            out_specs=out_spec,
        ),
        compiler_params=pltpu.CompilerParams(
            dimension_semantics=("parallel",),
            vmem_limit_bytes=int(vmem_limit)),
        cost_estimate=cost,
    )(xf, *kernel_params)

    out = out[:rows] if rows_p != rows else out
    return out.reshape(B, L, F)


# ------------------- deterministic parameter construction ------------------ #

def make_params(key, n_features, num_channels, kernel_size=3,
                matmul_dtype=MATMUL_DTYPE):
    """Create torch-layout params, then convert to kernel layout.

    k=3 conv weights become (3, Cin, Cout) per-tap matrices (taps ordered
    [l-1, l, l+1]); ConvTranspose1d(stride=1) becomes a flipped-tap Conv1d
    with swapped channels.  Set matmul_dtype=jnp.float32 for exact-validation
    runs.
    """
    C0, C1 = num_channels
    Cb = C1 // 2
    k = kernel_size
    keys = jax.random.split(key, 12)
    g = lambda kk, shape: 0.1 * jax.random.normal(kk, shape, jnp.float32)

    # torch layouts
    conv1_w = g(keys[0], (C0, n_features, k)); conv1_b = g(keys[1], (C0,))
    conv2_w = g(keys[2], (C1, C0, k));         conv2_b = g(keys[3], (C1,))
    bott_w  = g(keys[4], (Cb, C1, 1));         bott_b  = g(keys[5], (Cb,))
    dec1_w  = g(keys[6], (Cb, C1, 1));         dec1_b  = g(keys[7], (C1,))   # ConvTranspose1d(Cb,C1,1)
    dec2_w  = g(keys[8], (C1, C0, k));         dec2_b  = g(keys[9], (C0,))   # ConvTranspose1d(C1,C0,3,pad=1)
    dec3_w  = g(keys[10], (C0, n_features, k)); dec3_b = g(keys[11], (n_features,))

    torch_params = (conv1_w, conv1_b, conv2_w, conv2_b, bott_w, bott_b,
                    dec1_w, dec1_b, dec2_w, dec2_b, dec3_w, dec3_b)

    def pack_conv(w):          # Conv1d (Cout, Cin, k) -> (k, Cin, Cout)
        return jnp.transpose(w, (2, 1, 0))

    def pack_deconv(w):        # ConvTranspose1d (Cin, Cout, k) -> (k, Cin, Cout), taps flipped
        return jnp.flip(jnp.transpose(w, (2, 0, 1)), axis=0)

    c = lambda w: w.astype(matmul_dtype)             # matmul operands
    r = lambda b: b.reshape(1, -1).astype(jnp.float32)   # f32 bias rows
    kernel_params = (
        c(pack_conv(conv1_w)),  r(conv1_b),          # (3, F,  C0)
        c(pack_conv(conv2_w)),  r(conv2_b),          # (3, C0, C1)
        c(bott_w[:, :, 0].T),   r(bott_b),           # (C1, Cb)
        c(dec1_w[:, :, 0]),     r(dec1_b),           # (Cb, C1)
        c(pack_deconv(dec2_w)), r(dec2_b),           # (3, C1, C0)
        c(pack_deconv(dec3_w)), r(dec3_b),           # (3, C0, F)
    )
    return torch_params, kernel_params


# --------------------------- pure-JAX reference ----------------------------- #

def ref_forward(x, torch_params):
    """Mirrors the PyTorch forward (NCL conv semantics) exactly, in f32."""
    (c1w, c1b, c2w, c2b, bw, bb, d1w, d1b, d2w, d2b, d3w, d3b) = torch_params

    def conv1d(h, w, b, pad):
        # h: (B, Cin, L), w: (Cout, Cin, k)
        y = jax.lax.conv_general_dilated(
            h, w, window_strides=(1,), padding=[(pad, pad)],
            dimension_numbers=("NCH", "OIH", "NCH"))
        return y + b[None, :, None]

    def conv_transpose1d(h, w, b, pad):
        # w: (Cin, Cout, k); stride=1 equivalence to flipped conv
        k = w.shape[2]
        w_eq = jnp.flip(jnp.transpose(w, (1, 0, 2)), axis=2)
        return conv1d(h, w_eq, b, k - 1 - pad)

    h = jnp.transpose(x, (0, 2, 1))                       # permute(0,2,1)
    h = jax.nn.relu(conv1d(h, c1w, c1b, 1))
    h = jax.nn.relu(conv1d(h, c2w, c2b, 1))
    enc = conv1d(h, bw, bb, 0)
    h = jax.nn.relu(conv_transpose1d(enc, d1w, d1b, 0))
    h = jax.nn.relu(conv_transpose1d(h, d2w, d2b, 1))
    rec = conv_transpose1d(h, d3w, d3b, 1)
    return jnp.transpose(rec, (0, 2, 1))                  # permute back


# ---------------------------------- main ----------------------------------- #

if __name__ == "__main__":
    B, L = 2, 16
    n_features = 4
    num_channels = [8, 16]

    key = jax.random.PRNGKey(0)
    k_x, k_p = jax.random.split(key)
    x = jax.random.normal(k_x, (B, L, n_features), jnp.float32)

    torch_params, kernel_params = make_params(k_p, n_features, num_channels)

    out = jax.block_until_ready(tcn_autoencoder_forward(x, kernel_params))
    ref = jax.block_until_ready(ref_forward(x, torch_params))

    assert out.shape == (B, L, n_features), out.shape
    tol = 2e-2 if MATMUL_DTYPE == jnp.bfloat16 else 1e-4
    max_err = float(jnp.max(jnp.abs(out - ref)))
    assert jnp.allclose(out, ref, atol=tol, rtol=tol), max_err

    print("KERNEL_OK")
</pallas_src>

<mosaic_0001>
module attributes {stable_mosaic.version = 11 : i64} {
  func.func @tcn_ae_kernel(%arg0: i32, %arg1: memref<32x4xf32, #tpu.memory_space<vmem>>, %arg2: memref<3x4x8xbf16, #tpu.memory_space<vmem>>, %arg3: memref<1x8xf32, #tpu.memory_space<vmem>>, %arg4: memref<3x8x16xbf16, #tpu.memory_space<vmem>>, %arg5: memref<1x16xf32, #tpu.memory_space<vmem>>, %arg6: memref<16x8xbf16, #tpu.memory_space<vmem>>, %arg7: memref<1x8xf32, #tpu.memory_space<vmem>>, %arg8: memref<8x16xbf16, #tpu.memory_space<vmem>>, %arg9: memref<1x16xf32, #tpu.memory_space<vmem>>, %arg10: memref<3x16x8xbf16, #tpu.memory_space<vmem>>, %arg11: memref<1x8xf32, #tpu.memory_space<vmem>>, %arg12: memref<3x8x4xbf16, #tpu.memory_space<vmem>>, %arg13: memref<1x4xf32, #tpu.memory_space<vmem>>, %arg14: memref<32x4xf32, #tpu.memory_space<vmem>>) attributes {dimension_semantics = [#tpu.dimension_semantics<parallel>], iteration_bounds = array<i64: 1>, scalar_prefetch = 0 : i64, scratch_operands = 0 : i64, tpu.core_type = #tpu.core_type<tc>, window_params = [{transform_indices = @transform_0, window_bounds = array<i64: 32, 4>}, {pipeline_mode = #tpu.pipeline_mode<synchronous>, transform_indices = @transform_1, window_bounds = array<i64: 3, 4, 8>}, {pipeline_mode = #tpu.pipeline_mode<synchronous>, transform_indices = @transform_2, window_bounds = array<i64: 1, 8>}, {pipeline_mode = #tpu.pipeline_mode<synchronous>, transform_indices = @transform_3, window_bounds = array<i64: 3, 8, 16>}, {pipeline_mode = #tpu.pipeline_mode<synchronous>, transform_indices = @transform_4, window_bounds = array<i64: 1, 16>}, {pipeline_mode = #tpu.pipeline_mode<synchronous>, transform_indices = @transform_5, window_bounds = array<i64: 16, 8>}, {pipeline_mode = #tpu.pipeline_mode<synchronous>, transform_indices = @transform_6, window_bounds = array<i64: 1, 8>}, {pipeline_mode = #tpu.pipeline_mode<synchronous>, transform_indices = @transform_7, window_bounds = array<i64: 8, 16>}, {pipeline_mode = #tpu.pipeline_mode<synchronous>, transform_indices = @transform_8, window_bounds = array<i64: 1, 16>}, {pipeline_mode = #tpu.pipeline_mode<synchronous>, transform_indices = @transform_9, window_bounds = array<i64: 3, 16, 8>}, {pipeline_mode = #tpu.pipeline_mode<synchronous>, transform_indices = @transform_10, window_bounds = array<i64: 1, 8>}, {pipeline_mode = #tpu.pipeline_mode<synchronous>, transform_indices = @transform_11, window_bounds = array<i64: 3, 8, 4>}, {pipeline_mode = #tpu.pipeline_mode<synchronous>, transform_indices = @transform_12, window_bounds = array<i64: 1, 4>}, {transform_indices = @transform_13, window_bounds = array<i64: 32, 4>}]} {
    %c0 = arith.constant 0 : index
    %c0_0 = arith.constant 0 : index
    %0 = vector.load %arg1[%c0, %c0_0] : memref<32x4xf32, #tpu.memory_space<vmem>>, vector<32x4xf32>
    %1 = tpu.iota {dimensions = array<i32: 0>} : vector<32x1xi32>
    %c16_i32 = arith.constant 16 : i32
    %c0_i32 = arith.constant 0 : i32
    %2 = arith.cmpi eq, %c16_i32, %c0_i32 : i32
    %c1_i32 = arith.constant 1 : i32
    %3 = arith.select %2, %c1_i32, %c16_i32 : i32
    %4 = vector.broadcast %3 : i32 to vector<32x1xi32>
    %5 = arith.remsi %1, %4 : vector<32x1xi32>
    %c0_i32_1 = arith.constant 0 : i32
    %6 = vector.broadcast %c0_i32_1 : i32 to vector<32x1xi32>
    %7 = arith.cmpi ne, %5, %6 : vector<32x1xi32>
    %c0_i32_2 = arith.constant 0 : i32
    %8 = vector.broadcast %c0_i32_2 : i32 to vector<32x1xi32>
    %9 = arith.cmpi slt, %5, %8 : vector<32x1xi32>
    %c0_i32_3 = arith.constant 0 : i32
    %10 = arith.cmpi slt, %3, %c0_i32_3 : i32
    %11 = vector.broadcast %10 : i1 to vector<32x1xi1>
    %12 = vector.broadcast %11 : vector<32x1xi1> to vector<32x1xi1>
    %13 = arith.xori %9, %12 : vector<32x1xi1>
    %14 = arith.andi %13, %7 : vector<32x1xi1>
    %15 = vector.broadcast %3 : i32 to vector<32x1xi32>
    %16 = arith.addi %5, %15 : vector<32x1xi32>
    %17 = arith.select %14, %16, %5 : vector<32x1xi1>, vector<32x1xi32>
    %c0_i32_4 = arith.constant 0 : i32
    %18 = vector.broadcast %c0_i32_4 : i32 to vector<32x1xi32>
    %19 = arith.cmpi ne, %17, %18 : vector<32x1xi32>
    %c16_i32_5 = arith.constant 16 : i32
    %c0_i32_6 = arith.constant 0 : i32
    %20 = arith.cmpi eq, %c16_i32_5, %c0_i32_6 : i32
    %c1_i32_7 = arith.constant 1 : i32
    %21 = arith.select %20, %c1_i32_7, %c16_i32_5 : i32
    %22 = vector.broadcast %21 : i32 to vector<32x1xi32>
    %23 = arith.remsi %1, %22 : vector<32x1xi32>
    %c0_i32_8 = arith.constant 0 : i32
    %24 = vector.broadcast %c0_i32_8 : i32 to vector<32x1xi32>
    %25 = arith.cmpi ne, %23, %24 : vector<32x1xi32>
    %c0_i32_9 = arith.constant 0 : i32
    %26 = vector.broadcast %c0_i32_9 : i32 to vector<32x1xi32>
    %27 = arith.cmpi slt, %23, %26 : vector<32x1xi32>
    %c0_i32_10 = arith.constant 0 : i32
    %28 = arith.cmpi slt, %21, %c0_i32_10 : i32
    %29 = vector.broadcast %28 : i1 to vector<32x1xi1>
    %30 = vector.broadcast %29 : vector<32x1xi1> to vector<32x1xi1>
    %31 = arith.xori %27, %30 : vector<32x1xi1>
    %32 = arith.andi %31, %25 : vector<32x1xi1>
    %33 = vector.broadcast %21 : i32 to vector<32x1xi32>
    %34 = arith.addi %23, %33 : vector<32x1xi32>
    %35 = arith.select %32, %34, %23 : vector<32x1xi1>, vector<32x1xi32>
    %c15_i32 = arith.constant 15 : i32
    %36 = vector.broadcast %c15_i32 : i32 to vector<32x1xi32>
    %37 = arith.cmpi ne, %35, %36 : vector<32x1xi32>
    %c1_i32_11 = arith.constant 1 : i32
    %38 = tpu.dynamic_rotate %0 by %c1_i32_11 dim 0 : vector<32x4xf32>, i32 -> vector<32x4xf32>
    %cst = arith.constant 0.000000e+00 : f32
    %39 = vector.shape_cast %19 : vector<32x1xi1> to vector<32x1xi1>
    %40 = vector.broadcast %39 : vector<32x1xi1> to vector<32x4xi1>
    %41 = vector.broadcast %cst : f32 to vector<32x4xf32>
    %42 = arith.select %40, %38, %41 : vector<32x4xi1>, vector<32x4xf32>
    %c31_i32 = arith.constant 31 : i32
    %43 = tpu.dynamic_rotate %0 by %c31_i32 dim 0 : vector<32x4xf32>, i32 -> vector<32x4xf32>
    %cst_12 = arith.constant 0.000000e+00 : f32
    %44 = vector.shape_cast %37 : vector<32x1xi1> to vector<32x1xi1>
    %45 = vector.broadcast %44 : vector<32x1xi1> to vector<32x4xi1>
    %46 = vector.broadcast %cst_12 : f32 to vector<32x4xf32>
    %47 = arith.select %45, %43, %46 : vector<32x4xi1>, vector<32x4xf32>
    %48 = arith.truncf %42 : vector<32x4xf32> to vector<32x4xbf16>
    %c0_13 = arith.constant 0 : index
    %c0_14 = arith.constant 0 : index
    %c0_15 = arith.constant 0 : index
    %49 = vector.load %arg2[%c0_13, %c0_14, %c0_15] : memref<3x4x8xbf16, #tpu.memory_space<vmem>>, vector<1x4x8xbf16>
    %50 = vector.shape_cast %49 : vector<1x4x8xbf16> to vector<4x8xbf16>
    %cst_16 = arith.constant dense<0.000000e+00> : vector<32x8xf32>
    %51 = tpu.matmul %48, %50, %cst_16 {dimension_numbers = #tpu.dot_dimension_numbers<[1], [0], [0], [1], [0, 0, 1, 1], [], []>} : vector<32x4xbf16>, vector<4x8xbf16>, vector<32x8xf32> -> vector<32x8xf32>
    %52 = arith.truncf %0 : vector<32x4xf32> to vector<32x4xbf16>
    %c1 = arith.constant 1 : index
    %c0_17 = arith.constant 0 : index
    %c0_18 = arith.constant 0 : index
    %53 = vector.load %arg2[%c1, %c0_17, %c0_18] : memref<3x4x8xbf16, #tpu.memory_space<vmem>>, vector<1x4x8xbf16>
    %54 = vector.shape_cast %53 : vector<1x4x8xbf16> to vector<4x8xbf16>
    %cst_19 = arith.constant dense<0.000000e+00> : vector<32x8xf32>
    %55 = tpu.matmul %52, %54, %cst_19 {dimension_numbers = #tpu.dot_dimension_numbers<[1], [0], [0], [1], [0, 0, 1, 1], [], []>} : vector<32x4xbf16>, vector<4x8xbf16>, vector<32x8xf32> -> vector<32x8xf32>
    %56 = arith.addf %51, %55 : vector<32x8xf32>
    %57 = arith.truncf %47 : vector<32x4xf32> to vector<32x4xbf16>
    %c2 = arith.constant 2 : index
    %c0_20 = arith.constant 0 : index
    %c0_21 = arith.constant 0 : index
    %58 = vector.load %arg2[%c2, %c0_20, %c0_21] : memref<3x4x8xbf16, #tpu.memory_space<vmem>>, vector<1x4x8xbf16>
    %59 = vector.shape_cast %58 : vector<1x4x8xbf16> to vector<4x8xbf16>
    %cst_22 = arith.constant dense<0.000000e+00> : vector<32x8xf32>
    %60 = tpu.matmul %57, %59, %cst_22 {dimension_numbers = #tpu.dot_dimension_numbers<[1], [0], [0], [1], [0, 0, 1, 1], [], []>} : vector<32x4xbf16>, vector<4x8xbf16>, vector<32x8xf32> -> vector<32x8xf32>
    %61 = arith.addf %56, %60 : vector<32x8xf32>
    %c0_23 = arith.constant 0 : index
    %c0_24 = arith.constant 0 : index
    %62 = vector.load %arg3[%c0_23, %c0_24] : memref<1x8xf32, #tpu.memory_space<vmem>>, vector<1x8xf32>
    %63 = vector.broadcast %62 : vector<1x8xf32> to vector<32x8xf32>
    %64 = arith.addf %61, %63 : vector<32x8xf32>
    %cst_25 = arith.constant 0.000000e+00 : f32
    %65 = vector.broadcast %cst_25 : f32 to vector<32x8xf32>
    %66 = arith.maximumf %64, %65 : vector<32x8xf32>
    %c1_i32_26 = arith.constant 1 : i32
    %67 = tpu.dynamic_rotate %66 by %c1_i32_26 dim 0 : vector<32x8xf32>, i32 -> vector<32x8xf32>
    %cst_27 = arith.constant 0.000000e+00 : f32
    %68 = vector.shape_cast %19 : vector<32x1xi1> to vector<32x1xi1>
    %69 = vector.broadcast %68 : vector<32x1xi1> to vector<32x8xi1>
    %70 = vector.broadcast %cst_27 : f32 to vector<32x8xf32>
    %71 = arith.select %69, %67, %70 : vector<32x8xi1>, vector<32x8xf32>
    %c31_i32_28 = arith.constant 31 : i32
    %72 = tpu.dynamic_rotate %66 by %c31_i32_28 dim 0 : vector<32x8xf32>, i32 -> vector<32x8xf32>
    %cst_29 = arith.constant 0.000000e+00 : f32
    %73 = vector.shape_cast %37 : vector<32x1xi1> to vector<32x1xi1>
    %74 = vector.broadcast %73 : vector<32x1xi1> to vector<32x8xi1>
    %75 = vector.broadcast %cst_29 : f32 to vector<32x8xf32>
    %76 = arith.select %74, %72, %75 : vector<32x8xi1>, vector<32x8xf32>
    %77 = arith.truncf %71 : vector<32x8xf32> to vector<32x8xbf16>
    %c0_30 = arith.constant 0 : index
    %c0_31 = arith.constant 0 : index
    %c0_32 = arith.constant 0 : index
    %78 = vector.load %arg4[%c0_30, %c0_31, %c0_32] : memref<3x8x16xbf16, #tpu.memory_space<vmem>>, vector<1x8x16xbf16>
    %79 = vector.shape_cast %78 : vector<1x8x16xbf16> to vector<8x16xbf16>
    %cst_33 = arith.constant dense<0.000000e+00> : vector<32x16xf32>
    %80 = tpu.matmul %77, %79, %cst_33 {dimension_numbers = #tpu.dot_dimension_numbers<[1], [0], [0], [1], [0, 0, 1, 1], [], []>} : vector<32x8xbf16>, vector<8x16xbf16>, vector<32x16xf32> -> vector<32x16xf32>
    %81 = arith.truncf %66 : vector<32x8xf32> to vector<32x8xbf16>
    %c1_34 = arith.constant 1 : index
    %c0_35 = arith.constant 0 : index
    %c0_36 = arith.constant 0 : index
    %82 = vector.load %arg4[%c1_34, %c0_35, %c0_36] : memref<3x8x16xbf16, #tpu.memory_space<vmem>>, vector<1x8x16xbf16>
    %83 = vector.shape_cast %82 : vector<1x8x16xbf16> to vector<8x16xbf16>
    %cst_37 = arith.constant dense<0.000000e+00> : vector<32x16xf32>
    %84 = tpu.matmul %81, %83, %cst_37 {dimension_numbers = #tpu.dot_dimension_numbers<[1], [0], [0], [1], [0, 0, 1, 1], [], []>} : vector<32x8xbf16>, vector<8x16xbf16>, vector<32x16xf32> -> vector<32x16xf32>
    %85 = arith.addf %80, %84 : vector<32x16xf32>
    %86 = arith.truncf %76 : vector<32x8xf32> to vector<32x8xbf16>
    %c2_38 = arith.constant 2 : index
    %c0_39 = arith.constant 0 : index
    %c0_40 = arith.constant 0 : index
    %87 = vector.load %arg4[%c2_38, %c0_39, %c0_40] : memref<3x8x16xbf16, #tpu.memory_space<vmem>>, vector<1x8x16xbf16>
    %88 = vector.shape_cast %87 : vector<1x8x16xbf16> to vector<8x16xbf16>
    %cst_41 = arith.constant dense<0.000000e+00> : vector<32x16xf32>
    %89 = tpu.matmul %86, %88, %cst_41 {dimension_numbers = #tpu.dot_dimension_numbers<[1], [0], [0], [1], [0, 0, 1, 1], [], []>} : vector<32x8xbf16>, vector<8x16xbf16>, vector<32x16xf32> -> vector<32x16xf32>
    %90 = arith.addf %85, %89 : vector<32x16xf32>
    %c0_42 = arith.constant 0 : index
    %c0_43 = arith.constant 0 : index
    %91 = vector.load %arg5[%c0_42, %c0_43] : memref<1x16xf32, #tpu.memory_space<vmem>>, vector<1x16xf32>
    %92 = vector.broadcast %91 : vector<1x16xf32> to vector<32x16xf32>
    %93 = arith.addf %90, %92 : vector<32x16xf32>
    %cst_44 = arith.constant 0.000000e+00 : f32
    %94 = vector.broadcast %cst_44 : f32 to vector<32x16xf32>
    %95 = arith.maximumf %93, %94 : vector<32x16xf32>
    %96 = arith.truncf %95 : vector<32x16xf32> to vector<32x16xbf16>
    %c0_45 = arith.constant 0 : index
    %c0_46 = arith.constant 0 : index
    %97 = vector.load %arg6[%c0_45, %c0_46] : memref<16x8xbf16, #tpu.memory_space<vmem>>, vector<16x8xbf16>
    %cst_47 = arith.constant dense<0.000000e+00> : vector<32x8xf32>
    %98 = tpu.matmul %96, %97, %cst_47 {dimension_numbers = #tpu.dot_dimension_numbers<[1], [0], [0], [1], [0, 0, 1, 1], [], []>} : vector<32x16xbf16>, vector<16x8xbf16>, vector<32x8xf32> -> vector<32x8xf32>
    %c0_48 = arith.constant 0 : index
    %c0_49 = arith.constant 0 : index
    %99 = vector.load %arg7[%c0_48, %c0_49] : memref<1x8xf32, #tpu.memory_space<vmem>>, vector<1x8xf32>
    %100 = vector.broadcast %99 : vector<1x8xf32> to vector<32x8xf32>
    %101 = arith.addf %98, %100 : vector<32x8xf32>
    %102 = arith.truncf %101 : vector<32x8xf32> to vector<32x8xbf16>
    %c0_50 = arith.constant 0 : index
    %c0_51 = arith.constant 0 : index
    %103 = vector.load %arg8[%c0_50, %c0_51] : memref<8x16xbf16, #tpu.memory_space<vmem>>, vector<8x16xbf16>
    %cst_52 = arith.constant dense<0.000000e+00> : vector<32x16xf32>
    %104 = tpu.matmul %102, %103, %cst_52 {dimension_numbers = #tpu.dot_dimension_numbers<[1], [0], [0], [1], [0, 0, 1, 1], [], []>} : vector<32x8xbf16>, vector<8x16xbf16>, vector<32x16xf32> -> vector<32x16xf32>
    %c0_53 = arith.constant 0 : index
    %c0_54 = arith.constant 0 : index
    %105 = vector.load %arg9[%c0_53, %c0_54] : memref<1x16xf32, #tpu.memory_space<vmem>>, vector<1x16xf32>
    %106 = vector.broadcast %105 : vector<1x16xf32> to vector<32x16xf32>
    %107 = arith.addf %104, %106 : vector<32x16xf32>
    %cst_55 = arith.constant 0.000000e+00 : f32
    %108 = vector.broadcast %cst_55 : f32 to vector<32x16xf32>
    %109 = arith.maximumf %107, %108 : vector<32x16xf32>
    %c1_i32_56 = arith.constant 1 : i32
    %110 = tpu.dynamic_rotate %109 by %c1_i32_56 dim 0 : vector<32x16xf32>, i32 -> vector<32x16xf32>
    %cst_57 = arith.constant 0.000000e+00 : f32
    %111 = vector.shape_cast %19 : vector<32x1xi1> to vector<32x1xi1>
    %112 = vector.broadcast %111 : vector<32x1xi1> to vector<32x16xi1>
    %113 = vector.broadcast %cst_57 : f32 to vector<32x16xf32>
    %114 = arith.select %112, %110, %113 : vector<32x16xi1>, vector<32x16xf32>
    %c31_i32_58 = arith.constant 31 : i32
    %115 = tpu.dynamic_rotate %109 by %c31_i32_58 dim 0 : vector<32x16xf32>, i32 -> vector<32x16xf32>
    %cst_59 = arith.constant 0.000000e+00 : f32
    %116 = vector.shape_cast %37 : vector<32x1xi1> to vector<32x1xi1>
    %117 = vector.broadcast %116 : vector<32x1xi1> to vector<32x16xi1>
    %118 = vector.broadcast %cst_59 : f32 to vector<32x16xf32>
    %119 = arith.select %117, %115, %118 : vector<32x16xi1>, vector<32x16xf32>
    %120 = arith.truncf %114 : vector<32x16xf32> to vector<32x16xbf16>
    %c0_60 = arith.constant 0 : index
    %c0_61 = arith.constant 0 : index
    %c0_62 = arith.constant 0 : index
    %121 = vector.load %arg10[%c0_60, %c0_61, %c0_62] : memref<3x16x8xbf16, #tpu.memory_space<vmem>>, vector<1x16x8xbf16>
    %122 = vector.shape_cast %121 : vector<1x16x8xbf16> to vector<16x8xbf16>
    %cst_63 = arith.constant dense<0.000000e+00> : vector<32x8xf32>
    %123 = tpu.matmul %120, %122, %cst_63 {dimension_numbers = #tpu.dot_dimension_numbers<[1], [0], [0], [1], [0, 0, 1, 1], [], []>} : vector<32x16xbf16>, vector<16x8xbf16>, vector<32x8xf32> -> vector<32x8xf32>
    %124 = arith.truncf %109 : vector<32x16xf32> to vector<32x16xbf16>
    %c1_64 = arith.constant 1 : index
    %c0_65 = arith.constant 0 : index
    %c0_66 = arith.constant 0 : index
    %125 = vector.load %arg10[%c1_64, %c0_65, %c0_66] : memref<3x16x8xbf16, #tpu.memory_space<vmem>>, vector<1x16x8xbf16>
    %126 = vector.shape_cast %125 : vector<1x16x8xbf16> to vector<16x8xbf16>
    %cst_67 = arith.constant dense<0.000000e+00> : vector<32x8xf32>
    %127 = tpu.matmul %124, %126, %cst_67 {dimension_numbers = #tpu.dot_dimension_numbers<[1], [0], [0], [1], [0, 0, 1, 1], [], []>} : vector<32x16xbf16>, vector<16x8xbf16>, vector<32x8xf32> -> vector<32x8xf32>
    %128 = arith.addf %123, %127 : vector<32x8xf32>
    %129 = arith.truncf %119 : vector<32x16xf32> to vector<32x16xbf16>
    %c2_68 = arith.constant 2 : index
    %c0_69 = arith.constant 0 : index
    %c0_70 = arith.constant 0 : index
    %130 = vector.load %arg10[%c2_68, %c0_69, %c0_70] : memref<3x16x8xbf16, #tpu.memory_space<vmem>>, vector<1x16x8xbf16>
    %131 = vector.shape_cast %130 : vector<1x16x8xbf16> to vector<16x8xbf16>
    %cst_71 = arith.constant dense<0.000000e+00> : vector<32x8xf32>
    %132 = tpu.matmul %129, %131, %cst_71 {dimension_numbers = #tpu.dot_dimension_numbers<[1], [0], [0], [1], [0, 0, 1, 1], [], []>} : vector<32x16xbf16>, vector<16x8xbf16>, vector<32x8xf32> -> vector<32x8xf32>
    %133 = arith.addf %128, %132 : vector<32x8xf32>
    %c0_72 = arith.constant 0 : index
    %c0_73 = arith.constant 0 : index
    %134 = vector.load %arg11[%c0_72, %c0_73] : memref<1x8xf32, #tpu.memory_space<vmem>>, vector<1x8xf32>
    %135 = vector.broadcast %134 : vector<1x8xf32> to vector<32x8xf32>
    %136 = arith.addf %133, %135 : vector<32x8xf32>
    %cst_74 = arith.constant 0.000000e+00 : f32
    %137 = vector.broadcast %cst_74 : f32 to vector<32x8xf32>
    %138 = arith.maximumf %136, %137 : vector<32x8xf32>
    %c1_i32_75 = arith.constant 1 : i32
    %139 = tpu.dynamic_rotate %138 by %c1_i32_75 dim 0 : vector<32x8xf32>, i32 -> vector<32x8xf32>
    %cst_76 = arith.constant 0.000000e+00 : f32
    %140 = vector.shape_cast %19 : vector<32x1xi1> to vector<32x1xi1>
    %141 = vector.broadcast %140 : vector<32x1xi1> to vector<32x8xi1>
    %142 = vector.broadcast %cst_76 : f32 to vector<32x8xf32>
    %143 = arith.select %141, %139, %142 : vector<32x8xi1>, vector<32x8xf32>
    %c31_i32_77 = arith.constant 31 : i32
    %144 = tpu.dynamic_rotate %138 by %c31_i32_77 dim 0 : vector<32x8xf32>, i32 -> vector<32x8xf32>
    %cst_78 = arith.constant 0.000000e+00 : f32
    %145 = vector.shape_cast %37 : vector<32x1xi1> to vector<32x1xi1>
    %146 = vector.broadcast %145 : vector<32x1xi1> to vector<32x8xi1>
    %147 = vector.broadcast %cst_78 : f32 to vector<32x8xf32>
    %148 = arith.select %146, %144, %147 : vector<32x8xi1>, vector<32x8xf32>
    %149 = arith.truncf %143 : vector<32x8xf32> to vector<32x8xbf16>
    %c0_79 = arith.constant 0 : index
    %c0_80 = arith.constant 0 : index
    %c0_81 = arith.constant 0 : index
    %150 = vector.load %arg12[%c0_79, %c0_80, %c0_81] : memref<3x8x4xbf16, #tpu.memory_space<vmem>>, vector<1x8x4xbf16>
    %151 = vector.shape_cast %150 : vector<1x8x4xbf16> to vector<8x4xbf16>
    %cst_82 = arith.constant dense<0.000000e+00> : vector<32x4xf32>
    %152 = tpu.matmul %149, %151, %cst_82 {dimension_numbers = #tpu.dot_dimension_numbers<[1], [0], [0], [1], [0, 0, 1, 1], [], []>} : vector<32x8xbf16>, vector<8x4xbf16>, vector<32x4xf32> -> vector<32x4xf32>
    %153 = arith.truncf %138 : vector<32x8xf32> to vector<32x8xbf16>
    %c1_83 = arith.constant 1 : index
    %c0_84 = arith.constant 0 : index
    %c0_85 = arith.constant 0 : index
    %154 = vector.load %arg12[%c1_83, %c0_84, %c0_85] : memref<3x8x4xbf16, #tpu.memory_space<vmem>>, vector<1x8x4xbf16>
    %155 = vector.shape_cast %154 : vector<1x8x4xbf16> to vector<8x4xbf16>
    %cst_86 = arith.constant dense<0.000000e+00> : vector<32x4xf32>
    %156 = tpu.matmul %153, %155, %cst_86 {dimension_numbers = #tpu.dot_dimension_numbers<[1], [0], [0], [1], [0, 0, 1, 1], [], []>} : vector<32x8xbf16>, vector<8x4xbf16>, vector<32x4xf32> -> vector<32x4xf32>
    %157 = arith.addf %152, %156 : vector<32x4xf32>
    %158 = arith.truncf %148 : vector<32x8xf32> to vector<32x8xbf16>
    %c2_87 = arith.constant 2 : index
    %c0_88 = arith.constant 0 : index
    %c0_89 = arith.constant 0 : index
    %159 = vector.load %arg12[%c2_87, %c0_88, %c0_89] : memref<3x8x4xbf16, #tpu.memory_space<vmem>>, vector<1x8x4xbf16>
    %160 = vector.shape_cast %159 : vector<1x8x4xbf16> to vector<8x4xbf16>
    %cst_90 = arith.constant dense<0.000000e+00> : vector<32x4xf32>
    %161 = tpu.matmul %158, %160, %cst_90 {dimension_numbers = #tpu.dot_dimension_numbers<[1], [0], [0], [1], [0, 0, 1, 1], [], []>} : vector<32x8xbf16>, vector<8x4xbf16>, vector<32x4xf32> -> vector<32x4xf32>
    %162 = arith.addf %157, %161 : vector<32x4xf32>
    %c0_91 = arith.constant 0 : index
    %c0_92 = arith.constant 0 : index
    %163 = vector.load %arg13[%c0_91, %c0_92] : memref<1x4xf32, #tpu.memory_space<vmem>>, vector<1x4xf32>
    %164 = vector.broadcast %163 : vector<1x4xf32> to vector<32x4xf32>
    %165 = arith.addf %162, %164 : vector<32x4xf32>
    %c0_93 = arith.constant 0 : index
    %c0_94 = arith.constant 0 : index
    %166 = vector.load %arg14[%c0_93, %c0_94] : memref<32x4xf32, #tpu.memory_space<vmem>>, vector<32x4xf32>
    tpu.vector_store %arg14[%c0_93, %c0_94], %165 {strides = array<i32>} : memref<32x4xf32, #tpu.memory_space<vmem>>, vector<32x4xf32>,
    return
  }
  func.func @transform_0(%arg0: i32) -> (i32, i32) {
    %c0_i32 = arith.constant 0 : i32
    %c0_i32_0 = arith.constant 0 : i32
    return %arg0, %c0_i32 : i32, i32
  }
  func.func @transform_1(%arg0: i32) -> (i32, i32, i32) {
    %c0_i32 = arith.constant 0 : i32
    %c0_i32_0 = arith.constant 0 : i32
    %c0_i32_1 = arith.constant 0 : i32
    %c0_i32_2 = arith.constant 0 : i32
    return %c0_i32, %c0_i32_0, %c0_i32_1 : i32, i32, i32
  }
  func.func @transform_2(%arg0: i32) -> (i32, i32) {
    %c0_i32 = arith.constant 0 : i32
    %c0_i32_0 = arith.constant 0 : i32
    %c0_i32_1 = arith.constant 0 : i32
    return %c0_i32, %c0_i32_0 : i32, i32
  }
  func.func @transform_3(%arg0: i32) -> (i32, i32, i32) {
    %c0_i32 = arith.constant 0 : i32
    %c0_i32_0 = arith.constant 0 : i32
    %c0_i32_1 = arith.constant 0 : i32
    %c0_i32_2 = arith.constant 0 : i32
    return %c0_i32, %c0_i32_0, %c0_i32_1 : i32, i32, i32
  }
  func.func @transform_4(%arg0: i32) -> (i32, i32) {
    %c0_i32 = arith.constant 0 : i32
    %c0_i32_0 = arith.constant 0 : i32
    %c0_i32_1 = arith.constant 0 : i32
    return %c0_i32, %c0_i32_0 : i32, i32
  }
  func.func @transform_5(%arg0: i32) -> (i32, i32) {
    %c0_i32 = arith.constant 0 : i32
    %c0_i32_0 = arith.constant 0 : i32
    %c0_i32_1 = arith.constant 0 : i32
    return %c0_i32, %c0_i32_0 : i32, i32
  }
  func.func @transform_6(%arg0: i32) -> (i32, i32) {
    %c0_i32 = arith.constant 0 : i32
    %c0_i32_0 = arith.constant 0 : i32
    %c0_i32_1 = arith.constant 0 : i32
    return %c0_i32, %c0_i32_0 : i32, i32
  }
  func.func @transform_7(%arg0: i32) -> (i32, i32) {
    %c0_i32 = arith.constant 0 : i32
    %c0_i32_0 = arith.constant 0 : i32
    %c0_i32_1 = arith.constant 0 : i32
    return %c0_i32, %c0_i32_0 : i32, i32
  }
  func.func @transform_8(%arg0: i32) -> (i32, i32) {
    %c0_i32 = arith.constant 0 : i32
    %c0_i32_0 = arith.constant 0 : i32
    %c0_i32_1 = arith.constant 0 : i32
    return %c0_i32, %c0_i32_0 : i32, i32
  }
  func.func @transform_9(%arg0: i32) -> (i32, i32, i32) {
    %c0_i32 = arith.constant 0 : i32
    %c0_i32_0 = arith.constant 0 : i32
    %c0_i32_1 = arith.constant 0 : i32
    %c0_i32_2 = arith.constant 0 : i32
    return %c0_i32, %c0_i32_0, %c0_i32_1 : i32, i32, i32
  }
  func.func @transform_10(%arg0: i32) -> (i32, i32) {
    %c0_i32 = arith.constant 0 : i32
    %c0_i32_0 = arith.constant 0 : i32
    %c0_i32_1 = arith.constant 0 : i32
    return %c0_i32, %c0_i32_0 : i32, i32
  }
  func.func @transform_11(%arg0: i32) -> (i32, i32, i32) {
    %c0_i32 = arith.constant 0 : i32
    %c0_i32_0 = arith.constant 0 : i32
    %c0_i32_1 = arith.constant 0 : i32
    %c0_i32_2 = arith.constant 0 : i32
    return %c0_i32, %c0_i32_0, %c0_i32_1 : i32, i32, i32
  }
  func.func @transform_12(%arg0: i32) -> (i32, i32) {
    %c0_i32 = arith.constant 0 : i32
    %c0_i32_0 = arith.constant 0 : i32
    %c0_i32_1 = arith.constant 0 : i32
    return %c0_i32, %c0_i32_0 : i32, i32
  }
  func.func @transform_13(%arg0: i32) -> (i32, i32) {
    %c0_i32 = arith.constant 0 : i32
    %c0_i32_0 = arith.constant 0 : i32
    return %arg0, %c0_i32 : i32, i32
  }
}

</mosaic_0001>

<llo_original>
// kernel: tpu_custom_call.1
$region0: #{tpu_custom_call.1}
  #allocation0 [shape = 'u32[]', space=smem, size = 0x4, offset = 0x4, fixed_abs, tag = 'smem constant byte address 0x4 - core index']
  #allocation1 [shape = 'u32[72,128]{1,0:T(1,128)}', space=vmem, size = 0x9000, scoped, tag = 'internal scratch']
  %s0 = inlined_call_operand.vmem [shape: f32[32,4], index: 0, kind: input, shape index: {}]
  %s1 = inlined_call_operand.vmem [shape: bf16[3,4,8], index: 1, kind: input, shape index: {}]
  %s2 = inlined_call_operand.vmem [shape: f32[1,8], index: 2, kind: input, shape index: {}]
  %s3 = inlined_call_operand.vmem [shape: bf16[3,8,16], index: 3, kind: input, shape index: {}]
  %s4 = inlined_call_operand.vmem [shape: f32[1,16], index: 4, kind: input, shape index: {}]
  %s5 = inlined_call_operand.vmem [shape: bf16[16,8], index: 5, kind: input, shape index: {}]
  %s6 = inlined_call_operand.vmem [shape: f32[1,8], index: 6, kind: input, shape index: {}]
  %s7 = inlined_call_operand.vmem [shape: bf16[8,16], index: 7, kind: input, shape index: {}]
  %s8 = inlined_call_operand.vmem [shape: f32[1,16], index: 8, kind: input, shape index: {}]
  %s9 = inlined_call_operand.vmem [shape: bf16[3,16,8], index: 9, kind: input, shape index: {}]
  %s10 = inlined_call_operand.vmem [shape: f32[1,8], index: 10, kind: input, shape index: {}]
  %s11 = inlined_call_operand.vmem [shape: bf16[3,8,4], index: 11, kind: input, shape index: {}]
  %s12 = inlined_call_operand.vmem [shape: f32[1,4], index: 12, kind: input, shape index: {}]
  %s13 = inlined_call_operand.vmem [shape: f32[32,4], index: 13, kind: output, shape index: {}]
  %s14 = sld [smem:[#allocation0]]
  $region62: #{tpu_custom_call.1} parent=0
    _
  %s16 = ssub.s32 1, %s14
  %s17 = scalar_select 0, %s16, %s14
  // Predicated region
  $region2: #{tpu_custom_call.1} parent=0 // pred_check
    _
  $region3: #{tpu_custom_call.1} parent=0 // pred_check_branch
    %19 = sbr.rel (0) target = $region5
  $region4: #{tpu_custom_call.1} parent=0 // pred_region
    _
  $region5: #{tpu_custom_call.1} parent=0 // pred_fallthru
    _
  // Predicated region
  $region6: #{tpu_custom_call.1} parent=0 // pred_check
    _
  $region7: #{tpu_custom_call.1} parent=0 // pred_check_branch
    %21 = sbr.rel (0) target = $region9
  $region8: #{tpu_custom_call.1} parent=0 // pred_region
    _
  $region9: #{tpu_custom_call.1} parent=0 // pred_fallthru
    _
  // Predicated region
  $region10: #{tpu_custom_call.1} parent=0 // pred_check
    _
  $region11: #{tpu_custom_call.1} parent=0 // pred_check_branch
    %23 = sbr.rel (0) target = $region13
  $region12: #{tpu_custom_call.1} parent=0 // pred_region
    _
  $region13: #{tpu_custom_call.1} parent=0 // pred_fallthru
    _
  // Predicated region
  $region14: #{tpu_custom_call.1} parent=0 // pred_check
    _
  $region15: #{tpu_custom_call.1} parent=0 // pred_check_branch
    %25 = sbr.rel (0) target = $region17
  $region16: #{tpu_custom_call.1} parent=0 // pred_region
    _
  $region17: #{tpu_custom_call.1} parent=0 // pred_fallthru
    _
  // Predicated region
  $region18: #{tpu_custom_call.1} parent=0 // pred_check
    _
  $region19: #{tpu_custom_call.1} parent=0 // pred_check_branch
    %27 = sbr.rel (0) target = $region21
  $region20: #{tpu_custom_call.1} parent=0 // pred_region
    _
  $region21: #{tpu_custom_call.1} parent=0 // pred_fallthru
    _
  // Predicated region
  $region22: #{tpu_custom_call.1} parent=0 // pred_check
    _
  $region23: #{tpu_custom_call.1} parent=0 // pred_check_branch
    %29 = sbr.rel (0) target = $region25
  $region24: #{tpu_custom_call.1} parent=0 // pred_region
    _
  $region25: #{tpu_custom_call.1} parent=0 // pred_fallthru
    _
  // Predicated region
  $region26: #{tpu_custom_call.1} parent=0 // pred_check
    _
  $region27: #{tpu_custom_call.1} parent=0 // pred_check_branch
    %31 = sbr.rel (0) target = $region29
  $region28: #{tpu_custom_call.1} parent=0 // pred_region
    _
  $region29: #{tpu_custom_call.1} parent=0 // pred_fallthru
    _
  // Predicated region
  $region30: #{tpu_custom_call.1} parent=0 // pred_check
    _
  $region31: #{tpu_custom_call.1} parent=0 // pred_check_branch
    %33 = sbr.rel (0) target = $region33
  $region32: #{tpu_custom_call.1} parent=0 // pred_region
    _
  $region33: #{tpu_custom_call.1} parent=0 // pred_fallthru
    _
  // Predicated region
  $region34: #{tpu_custom_call.1} parent=0 // pred_check
    _
  $region35: #{tpu_custom_call.1} parent=0 // pred_check_branch
    %35 = sbr.rel (0) target = $region37
  $region36: #{tpu_custom_call.1} parent=0 // pred_region
    _
  $region37: #{tpu_custom_call.1} parent=0 // pred_fallthru
    _
  // Predicated region
  $region38: #{tpu_custom_call.1} parent=0 // pred_check
    _
  $region39: #{tpu_custom_call.1} parent=0 // pred_check_branch
    %37 = sbr.rel (0) target = $region41
  $region40: #{tpu_custom_call.1} parent=0 // pred_region
    _
  $region41: #{tpu_custom_call.1} parent=0 // pred_fallthru
    _
  // Predicated region
  $region42: #{tpu_custom_call.1} parent=0 // pred_check
    _
  $region43: #{tpu_custom_call.1} parent=0 // pred_check_branch
    %39 = sbr.rel (0) target = $region45
  $region44: #{tpu_custom_call.1} parent=0 // pred_region
    _
  $region45: #{tpu_custom_call.1} parent=0 // pred_fallthru
    _
  // Predicated region
  $region46: #{tpu_custom_call.1} parent=0 // pred_check
    _
  $region47: #{tpu_custom_call.1} parent=0 // pred_check_branch
    %41 = sbr.rel (0) target = $region49
  $region48: #{tpu_custom_call.1} parent=0 // pred_region
    _
  $region49: #{tpu_custom_call.1} parent=0 // pred_fallthru
    _
  // Predicated region
  $region50: #{tpu_custom_call.1} parent=0 // pred_check
    _
  $region51: #{tpu_custom_call.1} parent=0 // pred_check_branch
    %43 = sbr.rel (0) target = $region53
  $region52: #{tpu_custom_call.1} parent=0 // pred_region
    _
  $region53: #{tpu_custom_call.1} parent=0 // pred_fallthru
    _
  %v45 = vld [vmem:[%s0] sm:$0xff]
  %v46 = vld [vmem:[%s0 + $0x8] sm:$0xff]
  %v47 = vld [vmem:[%s0 + $0x10] sm:$0xff]
  %v48 = vld [vmem:[%s0 + $0x18] sm:$0xff]
  %v49 = vlaneseq
  %v50 = vshrl.u32 %v49, 7
  %v51 = vadd.s32 %v50, 8
  %v52 = vadd.s32 %v50, 16
  %v53 = vadd.s32 %v50, 24
  %vm54 = vcmp.lt.s32.totalorder %v50, 0
  %v55 = vsub.s32 0, %v50
  %v56 = vsel %vm54, %v55, %v50
  %v57 = vshrl.u32 %v56, 4
  %v58 = vand.u32 %v56, 15
  %v59 = vsub.s32 0, %v58
  %v60 = vsel %vm54, %v59, %v58
  %vm61 = vcmp.lt.s32.totalorder %v51, 0
  %v62 = vsub.s32 0, %v51
  %v63 = vsel %vm61, %v62, %v51
  %v64 = vshrl.u32 %v63, 4
  %v65 = vand.u32 %v63, 15
  %v66 = vsub.s32 0, %v65
  %v67 = vsel %vm61, %v66, %v65
  %vm68 = vcmp.lt.s32.totalorder %v52, 0
  %v69 = vsub.s32 0, %v52
  %v70 = vsel %vm68, %v69, %v52
  %v71 = vshrl.u32 %v70, 4
  %v72 = vand.u32 %v70, 15
  %v73 = vsub.s32 0, %v72
  %v74 = vsel %vm68, %v73, %v72
  %vm75 = vcmp.lt.s32.totalorder %v53, 0
  %v76 = vsub.s32 0, %v53
  %v77 = vsel %vm75, %v76, %v53
  %v78 = vshrl.u32 %v77, 4
  %v79 = vand.u32 %v77, 15
  %v80 = vsub.s32 0, %v79
  %v81 = vsel %vm75, %v80, %v79
  %vm82 = vcmp.ne.s32.totalorder %v60, 0
  %vm83 = vcmp.ne.s32.totalorder %v67, 0
  %vm84 = vcmp.ne.s32.totalorder %v74, 0
  %vm85 = vcmp.ne.s32.totalorder %v81, 0
  %vm86 = vcmp.lt.s32.totalorder %v60, 0
  %vm87 = vcmp.lt.s32.totalorder %v67, 0
  %vm88 = vcmp.lt.s32.totalorder %v74, 0
  %vm89 = vcmp.lt.s32.totalorder %v81, 0
  %vm90 = vmand %vm86, %vm82
  %vm91 = vmand %vm87, %vm83
  %vm92 = vmand %vm88, %vm84
  %vm93 = vmand %vm89, %vm85
  %v94 = vadd.s32 %v60, 16
  %v95 = vadd.s32 %v67, 16
  %v96 = vadd.s32 %v74, 16
  %v97 = vadd.s32 %v81, 16
  %v98 = vsel %vm90, %v94, %v60
  %v99 = vsel %vm91, %v95, %v67
  %v100 = vsel %vm92, %v96, %v74
  %v101 = vsel %vm93, %v97, %v81
  %vm102 = vcmp.ne.s32.totalorder %v98, 0
  %vm103 = vcmp.ne.s32.totalorder %v99, 0
  %vm104 = vcmp.ne.s32.totalorder %v100, 0
  %vm105 = vcmp.ne.s32.totalorder %v101, 0
  %vm106 = vcmp.ne.s32.totalorder %v98, 15
  %vm107 = vcmp.ne.s32.totalorder %v99, 15
  %vm108 = vcmp.ne.s32.totalorder %v100, 15
  %vm109 = vcmp.ne.s32.totalorder %v101, 15
  %v110 = vrot.slane %v45, 7
  %v111 = vrot.slane %v46, 7
  %v112 = vrot.slane %v47, 7
  %v113 = vrot.slane %v48, 7
  %vm114 = vcmp.lt.s32.totalorder %v50, 1
  %v115 = vsel %vm114, %v112, %v113
  %v116 = vsel %vm114, %v111, %v112
  %v117 = vsel %vm114, %v110, %v111
  %v118 = vsel %vm114, %v113, %v110
  %v119 = vsel %vm102, 1, 0
  %v120 = vsel %vm103, 1, 0
  %v121 = vsel %vm104, 1, 0
  %v122 = vsel %vm105, 1, 0
  %vm123 = vcmp.eq.s32.totalorder %v119, 1
  %vm124 = vcmp.eq.s32.totalorder %v120, 1
  %vm125 = vcmp.eq.s32.totalorder %v121, 1
  %vm126 = vcmp.eq.s32.totalorder %v122, 1
  %v127 = vsel %vm123, %v118, 0.0
  %v128 = vsel %vm124, %v117, 0.0
  %v129 = vsel %vm125, %v116, 0.0
  %v130 = vsel %vm126, %v115, 0.0
  %v131 = vrot.slane %v45, 1
  %v132 = vrot.slane %v46, 1
  %v133 = vrot.slane %v47, 1
  %v134 = vrot.slane %v48, 1
  %vm135 = vcmp.lt.s32.totalorder %v50, 7
  %v136 = vsel %vm135, %v133, %v134
  %v137 = vsel %vm135, %v132, %v133
  %v138 = vsel %vm135, %v131, %v132
  %v139 = vsel %vm135, %v134, %v131
  %v140 = vsel %vm106, 1, 0
  %v141 = vsel %vm107, 1, 0
  %v142 = vsel %vm108, 1, 0
  %v143 = vsel %vm109, 1, 0
  %vm144 = vcmp.eq.s32.totalorder %v140, 1
  %vm145 = vcmp.eq.s32.totalorder %v141, 1
  %vm146 = vcmp.eq.s32.totalorder %v142, 1
  %vm147 = vcmp.eq.s32.totalorder %v143, 1
  %v148 = vsel %vm144, %v138, 0.0
  %v149 = vsel %vm145, %v137, 0.0
  %v150 = vsel %vm146, %v136, 0.0
  %v151 = vsel %vm147, %v139, 0.0
  %v152 = vpack.c.bf16 %v128, %v127
  %v153 = vpack.c.bf16 %v130, %v129
  %v154 = vld [vmem:[%s1] sm:$0x3]
  %v155 = vpack.c.bf16 %v46, %v45
  %v156 = vpack.c.bf16 %v48, %v47
  %s157 = scalar_lea.vmem %s1, 2
  %v158 = vld [vmem:[%s157] sm:$0x3]
  %vm159 = vcmask 31744
  %v161 = vsel %vm159, %v155, 0
  %v164 = vsel %vm159, %v156, 0
  %vm166 = vcmask 1041408
  %v168 = vsel %vm166, %v158, 0
  %170 = vmatpush.bf16.msra.mxu0 0
  %171 = vmatpush.bf16.msra.mxu0 0
  %172 = vmatpush.bf16.msra.mxu0 0
  %173 = vmatpush.bf16.msra.mxu0 0
  %174 = vmatpush.bf16.msra.mxu0 0
  %175 = vmatpush.bf16.msra.mxu0 0
  %176 = vmatpush.bf16.msra.mxu0 0
  %177 = vmatpush.bf16.msra.mxu0 %v168
  %178 = vmatmul.bf16.gmra.mxu0 %v161
  %v179 = vpop.f32.mrf.mxu0
  %v180 = vadd.f32 0.0, %v179
  %v181 = vpop.f32.mrf.mxu0
  %v182 = vadd.f32 0.0, %v181
  %183 = vmatmul.bf16.gmra.mxu0 %v164
  %v184 = vpop.f32.mrf.mxu0
  %v185 = vadd.f32 0.0, %v184
  %v186 = vpop.f32.mrf.mxu0
  %v187 = vadd.f32 0.0, %v186
  %188 = vdwg.mxu0
  %v190 = vsel %vm159, %v152, 0
  %v193 = vsel %vm159, %v153, 0
  %v196 = vsel %vm166, %v154, 0
  %198 = vmatpush.bf16.msra.mxu0 0
  %199 = vmatpush.bf16.msra.mxu0 0
  %200 = vmatpush.bf16.msra.mxu0 0
  %201 = vmatpush.bf16.msra.mxu0 0
  %202 = vmatpush.bf16.msra.mxu0 0
  %203 = vmatpush.bf16.msra.mxu0 0
  %204 = vmatpush.bf16.msra.mxu0 0
  %205 = vmatpush.bf16.msra.mxu0 %v196
  %206 = vmatmul.bf16.gmra.mxu0 %v190
  %v207 = vpop.f32.mrf.mxu0
  %v208 = vadd.f32 %v180, %v207
  %v209 = vpop.f32.mrf.mxu0
  %v210 = vadd.f32 %v182, %v209
  %211 = vmatmul.bf16.gmra.mxu0 %v193
  %v212 = vpop.f32.mrf.mxu0
  %v213 = vadd.f32 %v185, %v212
  %v214 = vpop.f32.mrf.mxu0
  %v215 = vadd.f32 %v187, %v214
  %216 = vdwg.mxu0
  %v217 = vpack.c.bf16 %v149, %v148
  %v218 = vpack.c.bf16 %v151, %v150
  %s219 = scalar_lea.vmem %s1, 4
  %v220 = vld [vmem:[%s219] sm:$0x3]
  %v222 = vsel %vm159, %v217, 0
  %v225 = vsel %vm159, %v218, 0
  %v228 = vsel %vm166, %v220, 0
  %230 = vmatpush.bf16.msra.mxu0 0
  %231 = vmatpush.bf16.msra.mxu0 0
  %232 = vmatpush.bf16.msra.mxu0 0
  %233 = vmatpush.bf16.msra.mxu0 0
  %234 = vmatpush.bf16.msra.mxu0 0
  %235 = vmatpush.bf16.msra.mxu0 0
  %236 = vmatpush.bf16.msra.mxu0 0
  %237 = vmatpush.bf16.msra.mxu0 %v228
  %238 = vmatmul.bf16.gmra.mxu0 %v222
  %v239 = vpop.f32.mrf.mxu0
  %v240 = vadd.f32 0.0, %v239
  %v241 = vpop.f32.mrf.mxu0
  %v242 = vadd.f32 0.0, %v241
  %243 = vmatmul.bf16.gmra.mxu0 %v225
  %v244 = vpop.f32.mrf.mxu0
  %v245 = vadd.f32 0.0, %v244
  %v246 = vpop.f32.mrf.mxu0
  %v247 = vadd.f32 0.0, %v246
  %248 = vdwg.mxu0
  %v249 = vadd.f32 %v208, %v240
  %v250 = vadd.f32 %v210, %v242
  %v251 = vadd.f32 %v213, %v245
  %v252 = vadd.f32 %v215, %v247
  %v253 = vld [vmem:[%s2] sm:$0x1]
  %v255 = vperm.slane %v253, 0
  %v257 = vadd.f32 %v249, %v255
  %v258 = vadd.f32 %v250, %v255
  %v259 = vadd.f32 %v251, %v255
  %v260 = vadd.f32 %v252, %v255
  %v261 = vmax.f32 %v257, 0.0
  %v262 = vmax.f32 %v258, 0.0
  %v263 = vmax.f32 %v259, 0.0
  %v264 = vmax.f32 %v260, 0.0
  %v265 = vrot.slane %v261, 7
  %v266 = vrot.slane %v262, 7
  %v267 = vrot.slane %v263, 7
  %v268 = vrot.slane %v264, 7
  %v269 = vsel %vm114, %v267, %v268
  %v270 = vsel %vm114, %v266, %v267
  %v271 = vsel %vm114, %v265, %v266
  %v272 = vsel %vm114, %v268, %v265
  %v273 = vsel %vm123, %v272, 0.0
  %v274 = vsel %vm124, %v271, 0.0
  %v275 = vsel %vm125, %v270, 0.0
  %v276 = vsel %vm126, %v269, 0.0
  %v277 = vrot.slane %v261, 1
  %v278 = vrot.slane %v262, 1
  %v279 = vrot.slane %v263, 1
  %v280 = vrot.slane %v264, 1
  %v281 = vsel %vm135, %v279, %v280
  %v282 = vsel %vm135, %v278, %v279
  %v283 = vsel %vm135, %v277, %v278
  %v284 = vsel %vm135, %v280, %v277
  %v285 = vsel %vm144, %v283, 0.0
  %v286 = vsel %vm145, %v282, 0.0
  %v287 = vsel %vm146, %v281, 0.0
  %v288 = vsel %vm147, %v284, 0.0
  %v289 = vpack.c.bf16 %v274, %v273
  %v290 = vpack.c.bf16 %v276, %v275
  %v291 = vld [vmem:[%s3] sm:$0xf]
  %v292 = vpack.c.bf16 %v262, %v261
  %v293 = vpack.c.bf16 %v264, %v263
  %s294 = scalar_lea.vmem %s3, 4
  %v295 = vld [vmem:[%s294] sm:$0xf]
  %vm296 = vcmask 64512
  %v298 = vsel %vm296, %v292, 0
  %v301 = vsel %vm296, %v293, 0
  %vm303 = vcmask 1043456
  %v305 = vsel %vm303, %v295, 0
  %307 = vmatpush.bf16.msra.mxu0 0
  %308 = vmatpush.bf16.msra.mxu0 0
  %309 = vmatpush.bf16.msra.mxu0 0
  %310 = vmatpush.bf16.msra.mxu0 0
  %311 = vmatpush.bf16.msra.mxu0 0
  %312 = vmatpush.bf16.msra.mxu0 0
  %313 = vmatpush.bf16.msra.mxu0 0
  %314 = vmatpush.bf16.msra.mxu0 %v305
  %315 = vmatmul.bf16.gmra.mxu0 %v298
  %v316 = vpop.f32.mrf.mxu0
  %v317 = vadd.f32 0.0, %v316
  %v318 = vpop.f32.mrf.mxu0
  %v319 = vadd.f32 0.0, %v318
  %320 = vmatmul.bf16.gmra.mxu0 %v301
  %v321 = vpop.f32.mrf.mxu0
  %v322 = vadd.f32 0.0, %v321
  %v323 = vpop.f32.mrf.mxu0
  %v324 = vadd.f32 0.0, %v323
  %325 = vdwg.mxu0
  %v327 = vsel %vm296, %v289, 0
  %v330 = vsel %vm296, %v290, 0
  %v333 = vsel %vm303, %v291, 0
  %335 = vmatpush.bf16.msra.mxu0 0
  %336 = vmatpush.bf16.msra.mxu0 0
  %337 = vmatpush.bf16.msra.mxu0 0
  %338 = vmatpush.bf16.msra.mxu0 0
  %339 = vmatpush.bf16.msra.mxu0 0
  %340 = vmatpush.bf16.msra.mxu0 0
  %341 = vmatpush.bf16.msra.mxu0 0
  %342 = vmatpush.bf16.msra.mxu0 %v333
  %343 = vmatmul.bf16.gmra.mxu0 %v327
  %v344 = vpop.f32.mrf.mxu0
  %v345 = vadd.f32 %v317, %v344
  %v346 = vpop.f32.mrf.mxu0
  %v347 = vadd.f32 %v319, %v346
  %348 = vmatmul.bf16.gmra.mxu0 %v330
  %v349 = vpop.f32.mrf.mxu0
  %v350 = vadd.f32 %v322, %v349
  %v351 = vpop.f32.mrf.mxu0
  %v352 = vadd.f32 %v324, %v351
  %353 = vdwg.mxu0
  %v354 = vpack.c.bf16 %v286, %v285
  %v355 = vpack.c.bf16 %v288, %v287
  %s356 = scalar_lea.vmem %s3, 8
  %v357 = vld [vmem:[%s356] sm:$0xf]
  %v359 = vsel %vm296, %v354, 0
  %v362 = vsel %vm296, %v355, 0
  %v365 = vsel %vm303, %v357, 0
  %367 = vmatpush.bf16.msra.mxu0 0
  %368 = vmatpush.bf16.msra.mxu0 0
  %369 = vmatpush.bf16.msra.mxu0 0
  %370 = vmatpush.bf16.msra.mxu0 0
  %371 = vmatpush.bf16.msra.mxu0 0
  %372 = vmatpush.bf16.msra.mxu0 0
  %373 = vmatpush.bf16.msra.mxu0 0
  %374 = vmatpush.bf16.msra.mxu0 %v365
  %375 = vmatmul.bf16.gmra.mxu0 %v359
  %v376 = vpop.f32.mrf.mxu0
  %v377 = vadd.f32 0.0, %v376
  %v378 = vpop.f32.mrf.mxu0
  %v379 = vadd.f32 0.0, %v378
  %380 = vmatmul.bf16.gmra.mxu0 %v362
  %v381 = vpop.f32.mrf.mxu0
  %v382 = vadd.f32 0.0, %v381
  %v383 = vpop.f32.mrf.mxu0
  %v384 = vadd.f32 0.0, %v383
  %385 = vdwg.mxu0
  %v386 = vadd.f32 %v345, %v377
  %v387 = vadd.f32 %v347, %v379
  %v388 = vadd.f32 %v350, %v382
  %v389 = vadd.f32 %v352, %v384
  %v390 = vld [vmem:[%s4] sm:$0x1]
  %v392 = vperm.slane %v390, 0
  %v394 = vadd.f32 %v386, %v392
  %v395 = vadd.f32 %v387, %v392
  %v396 = vadd.f32 %v388, %v392
  %v397 = vadd.f32 %v389, %v392
  %v398 = vmax.f32 %v394, 0.0
  %v399 = vmax.f32 %v395, 0.0
  %v400 = vmax.f32 %v396, 0.0
  %v401 = vmax.f32 %v397, 0.0
  %v402 = vpack.c.bf16 %v399, %v398
  %v403 = vpack.c.bf16 %v401, %v400
  %v404 = vld [vmem:[%s5] sm:$0xf]
  %v405 = vld [vmem:[%s5 + $0x4] sm:$0xf]
  %v406 = vld [vmem:[%s6] sm:$0x1]
  %v408 = vperm.slane %v406, 0
  %v412 = vunpack.c.l.b16 %v404
  %v413 = vunpack.c.l.b16 %v405
  %v414 = vpack.c.b16 %v413, %v412
  %vm416 = vcmask 130048
  %v418 = vsel %vm416, %v402, 0
  %v421 = vsel %vm416, %v403, 0
  %423 = vmatpush.bf16.msra.mxu0 0
  %424 = vmatpush.bf16.msra.mxu0 0
  %425 = vmatpush.bf16.msra.mxu0 0
  %426 = vmatpush.bf16.msra.mxu0 0
  %427 = vmatpush.bf16.msra.mxu0 0
  %428 = vmatpush.bf16.msra.mxu0 0
  %429 = vmatpush.bf16.msra.mxu0 0
  %430 = vmatpush.bf16.msra.mxu0 %v414
  %431 = vmatmul.bf16.gmra.mxu0 %v418
  %v432 = vpop.f32.mrf.mxu0
  %v433 = vadd.f32 %v408, %v432
  %v434 = vpop.f32.mrf.mxu0
  %v435 = vadd.f32 %v408, %v434
  %436 = vmatmul.bf16.gmra.mxu0 %v421
  %v437 = vpop.f32.mrf.mxu0
  %v438 = vadd.f32 %v408, %v437
  %v439 = vpop.f32.mrf.mxu0
  %v440 = vadd.f32 %v408, %v439
  %441 = vdwg.mxu0
  %v442 = vpack.c.bf16 %v435, %v433
  %v443 = vpack.c.bf16 %v440, %v438
  %v444 = vld [vmem:[%s7] sm:$0xf]
  %v445 = vld [vmem:[%s8] sm:$0x1]
  %v447 = vperm.slane %v445, 0
  %v450 = vsel %vm296, %v442, 0
  %v453 = vsel %vm296, %v443, 0
  %v456 = vsel %vm303, %v444, 0
  %458 = vmatpush.bf16.msra.mxu0 0
  %459 = vmatpush.bf16.msra.mxu0 0
  %460 = vmatpush.bf16.msra.mxu0 0
  %461 = vmatpush.bf16.msra.mxu0 0
  %462 = vmatpush.bf16.msra.mxu0 0
  %463 = vmatpush.bf16.msra.mxu0 0
  %464 = vmatpush.bf16.msra.mxu0 0
  %465 = vmatpush.bf16.msra.mxu0 %v456
  %466 = vmatmul.bf16.gmra.mxu0 %v450
  %v467 = vpop.f32.mrf.mxu0
  %v468 = vadd.f32 %v447, %v467
  %v469 = vpop.f32.mrf.mxu0
  %v470 = vadd.f32 %v447, %v469
  %471 = vmatmul.bf16.gmra.mxu0 %v453
  %v472 = vpop.f32.mrf.mxu0
  %v473 = vadd.f32 %v447, %v472
  %v474 = vpop.f32.mrf.mxu0
  %v475 = vadd.f32 %v447, %v474
  %476 = vdwg.mxu0
  %v477 = vmax.f32 %v468, 0.0
  %v478 = vmax.f32 %v470, 0.0
  %v479 = vmax.f32 %v473, 0.0
  %v480 = vmax.f32 %v475, 0.0
  %v481 = vrot.slane %v477, 7
  %v482 = vrot.slane %v478, 7
  %v483 = vrot.slane %v479, 7
  %v484 = vrot.slane %v480, 7
  %v485 = vsel %vm114, %v483, %v484
  %v486 = vsel %vm114, %v482, %v483
  %v487 = vsel %vm114, %v481, %v482
  %v488 = vsel %vm114, %v484, %v481
  %v489 = vsel %vm123, %v488, 0.0
  %v490 = vsel %vm124, %v487, 0.0
  %v491 = vsel %vm125, %v486, 0.0
  %v492 = vsel %vm126, %v485, 0.0
  %v493 = vrot.slane %v477, 1
  %v494 = vrot.slane %v478, 1
  %v495 = vrot.slane %v479, 1
  %v496 = vrot.slane %v480, 1
  %v497 = vsel %vm135, %v495, %v496
  %v498 = vsel %vm135, %v494, %v495
  %v499 = vsel %vm135, %v493, %v494
  %v500 = vsel %vm135, %v496, %v493
  %v501 = vsel %vm144, %v499, 0.0
  %v502 = vsel %vm145, %v498, 0.0
  %v503 = vsel %vm146, %v497, 0.0
  %v504 = vsel %vm147, %v500, 0.0
  %v505 = vpack.c.bf16 %v490, %v489
  %v506 = vpack.c.bf16 %v492, %v491
  %v507 = vld [vmem:[%s9] sm:$0xf]
  %v508 = vld [vmem:[%s9 + $0x4] sm:$0xf]
  %v509 = vpack.c.bf16 %v478, %v477
  %v510 = vpack.c.bf16 %v480, %v479
  %s511 = scalar_lea.vmem %s9, 8
  %v512 = vld [vmem:[%s511] sm:$0xf]
  %v513 = vld [vmem:[%s511 + $0x4] sm:$0xf]
  %v516 = vunpack.c.l.b16 %v512
  %v517 = vunpack.c.l.b16 %v513
  %v518 = vpack.c.b16 %v517, %v516
  %v521 = vsel %vm416, %v509, 0
  %v524 = vsel %vm416, %v510, 0
  %526 = vmatpush.bf16.msra.mxu0 0
  %527 = vmatpush.bf16.msra.mxu0 0
  %528 = vmatpush.bf16.msra.mxu0 0
  %529 = vmatpush.bf16.msra.mxu0 0
  %530 = vmatpush.bf16.msra.mxu0 0
  %531 = vmatpush.bf16.msra.mxu0 0
  %532 = vmatpush.bf16.msra.mxu0 0
  %533 = vmatpush.bf16.msra.mxu0 %v518
  %534 = vmatmul.bf16.gmra.mxu0 %v521
  %v535 = vpop.f32.mrf.mxu0
  %v536 = vadd.f32 0.0, %v535
  %v537 = vpop.f32.mrf.mxu0
  %v538 = vadd.f32 0.0, %v537
  %539 = vmatmul.bf16.gmra.mxu0 %v524
  %v540 = vpop.f32.mrf.mxu0
  %v541 = vadd.f32 0.0, %v540
  %v542 = vpop.f32.mrf.mxu0
  %v543 = vadd.f32 0.0, %v542
  %544 = vdwg.mxu0
  %v547 = vunpack.c.l.b16 %v507
  %v548 = vunpack.c.l.b16 %v508
  %v549 = vpack.c.b16 %v548, %v547
  %v552 = vsel %vm416, %v505, 0
  %v555 = vsel %vm416, %v506, 0
  %557 = vmatpush.bf16.msra.mxu0 0
  %558 = vmatpush.bf16.msra.mxu0 0
  %559 = vmatpush.bf16.msra.mxu0 0
  %560 = vmatpush.bf16.msra.mxu0 0
  %561 = vmatpush.bf16.msra.mxu0 0
  %562 = vmatpush.bf16.msra.mxu0 0
  %563 = vmatpush.bf16.msra.mxu0 0
  %564 = vmatpush.bf16.msra.mxu0 %v549
  %565 = vmatmul.bf16.gmra.mxu0 %v552
  %v566 = vpop.f32.mrf.mxu0
  %v567 = vadd.f32 %v536, %v566
  %v568 = vpop.f32.mrf.mxu0
  %v569 = vadd.f32 %v538, %v568
  %570 = vmatmul.bf16.gmra.mxu0 %v555
  %v571 = vpop.f32.mrf.mxu0
  %v572 = vadd.f32 %v541, %v571
  %v573 = vpop.f32.mrf.mxu0
  %v574 = vadd.f32 %v543, %v573
  %575 = vdwg.mxu0
  %v576 = vpack.c.bf16 %v502, %v501
  %v577 = vpack.c.bf16 %v504, %v503
  %s578 = scalar_lea.vmem %s9, 16
  %v579 = vld [vmem:[%s578] sm:$0xf]
  %v580 = vld [vmem:[%s578 + $0x4] sm:$0xf]
  %v583 = vunpack.c.l.b16 %v579
  %v584 = vunpack.c.l.b16 %v580
  %v585 = vpack.c.b16 %v584, %v583
  %v588 = vsel %vm416, %v576, 0
  %v591 = vsel %vm416, %v577, 0
  %593 = vmatpush.bf16.msra.mxu0 0
  %594 = vmatpush.bf16.msra.mxu0 0
  %595 = vmatpush.bf16.msra.mxu0 0
  %596 = vmatpush.bf16.msra.mxu0 0
  %597 = vmatpush.bf16.msra.mxu0 0
  %598 = vmatpush.bf16.msra.mxu0 0
  %599 = vmatpush.bf16.msra.mxu0 0
  %600 = vmatpush.bf16.msra.mxu0 %v585
  %601 = vmatmul.bf16.gmra.mxu0 %v588
  %v602 = vpop.f32.mrf.mxu0
  %v603 = vadd.f32 0.0, %v602
  %v604 = vpop.f32.mrf.mxu0
  %v605 = vadd.f32 0.0, %v604
  %606 = vmatmul.bf16.gmra.mxu0 %v591
  %v607 = vpop.f32.mrf.mxu0
  %v608 = vadd.f32 0.0, %v607
  %v609 = vpop.f32.mrf.mxu0
  %v610 = vadd.f32 0.0, %v609
  %611 = vdwg.mxu0
  %v612 = vadd.f32 %v567, %v603
  %v613 = vadd.f32 %v569, %v605
  %v614 = vadd.f32 %v572, %v608
  %v615 = vadd.f32 %v574, %v610
  %v616 = vld [vmem:[%s10] sm:$0x1]
  %v618 = vperm.slane %v616, 0
  %v620 = vadd.f32 %v612, %v618
  %v621 = vadd.f32 %v613, %v618
  %v622 = vadd.f32 %v614, %v618
  %v623 = vadd.f32 %v615, %v618
  %v624 = vmax.f32 %v620, 0.0
  %v625 = vmax.f32 %v621, 0.0
  %v626 = vmax.f32 %v622, 0.0
  %v627 = vmax.f32 %v623, 0.0
  %v628 = vrot.slane %v624, 7
  %v629 = vrot.slane %v625, 7
  %v630 = vrot.slane %v626, 7
  %v631 = vrot.slane %v627, 7
  %v632 = vsel %vm114, %v630, %v631
  %v633 = vsel %vm114, %v629, %v630
  %v634 = vsel %vm114, %v628, %v629
  %v635 = vsel %vm114, %v631, %v628
  %v636 = vsel %vm123, %v635, 0.0
  %v637 = vsel %vm124, %v634, 0.0
  %v638 = vsel %vm125, %v633, 0.0
  %v639 = vsel %vm126, %v632, 0.0
  %v640 = vrot.slane %v624, 1
  %v641 = vrot.slane %v625, 1
  %v642 = vrot.slane %v626, 1
  %v643 = vrot.slane %v627, 1
  %v644 = vsel %vm135, %v642, %v643
  %v645 = vsel %vm135, %v641, %v642
  %v646 = vsel %vm135, %v640, %v641
  %v647 = vsel %vm135, %v643, %v640
  %v648 = vsel %vm144, %v646, 0.0
  %v649 = vsel %vm145, %v645, 0.0
  %v650 = vsel %vm146, %v644, 0.0
  %v651 = vsel %vm147, %v647, 0.0
  %v652 = vpack.c.bf16 %v637, %v636
  %v653 = vpack.c.bf16 %v639, %v638
  %v654 = vld [vmem:[%s11] sm:$0xf]
  %v655 = vpack.c.bf16 %v625, %v624
  %v656 = vpack.c.bf16 %v627, %v626
  %s657 = scalar_lea.vmem %s11, 4
  %v658 = vld [vmem:[%s657] sm:$0xf]
  %v660 = vsel %vm296, %v655, 0
  %v663 = vsel %vm296, %v656, 0
  %v666 = vsel %vm303, %v658, 0
  %668 = vmatpush.bf16.msra.mxu0 0
  %669 = vmatpush.bf16.msra.mxu0 0
  %670 = vmatpush.bf16.msra.mxu0 0
  %671 = vmatpush.bf16.msra.mxu0 0
  %672 = vmatpush.bf16.msra.mxu0 0
  %673 = vmatpush.bf16.msra.mxu0 0
  %674 = vmatpush.bf16.msra.mxu0 0
  %675 = vmatpush.bf16.msra.mxu0 %v666
  %676 = vmatmul.bf16.gmra.mxu0 %v660
  %v677 = vpop.f32.mrf.mxu0
  %v678 = vadd.f32 0.0, %v677
  %v679 = vpop.f32.mrf.mxu0
  %v680 = vadd.f32 0.0, %v679
  %681 = vmatmul.bf16.gmra.mxu0 %v663
  %v682 = vpop.f32.mrf.mxu0
  %v683 = vadd.f32 0.0, %v682
  %v684 = vpop.f32.mrf.mxu0
  %v685 = vadd.f32 0.0, %v684
  %686 = vdwg.mxu0
  %v688 = vsel %vm296, %v652, 0
  %v691 = vsel %vm296, %v653, 0
  %v694 = vsel %vm303, %v654, 0
  %696 = vmatpush.bf16.msra.mxu0 0
  %697 = vmatpush.bf16.msra.mxu0 0
  %698 = vmatpush.bf16.msra.mxu0 0
  %699 = vmatpush.bf16.msra.mxu0 0
  %700 = vmatpush.bf16.msra.mxu0 0
  %701 = vmatpush.bf16.msra.mxu0 0
  %702 = vmatpush.bf16.msra.mxu0 0
  %703 = vmatpush.bf16.msra.mxu0 %v694
  %704 = vmatmul.bf16.gmra.mxu0 %v688
  %v705 = vpop.f32.mrf.mxu0
  %v706 = vadd.f32 %v678, %v705
  %v707 = vpop.f32.mrf.mxu0
  %v708 = vadd.f32 %v680, %v707
  %709 = vmatmul.bf16.gmra.mxu0 %v691
  %v710 = vpop.f32.mrf.mxu0
  %v711 = vadd.f32 %v683, %v710
  %v712 = vpop.f32.mrf.mxu0
  %v713 = vadd.f32 %v685, %v712
  %714 = vdwg.mxu0
  %v715 = vpack.c.bf16 %v649, %v648
  %v716 = vpack.c.bf16 %v651, %v650
  %s717 = scalar_lea.vmem %s11, 8
  %v718 = vld [vmem:[%s717] sm:$0xf]
  %v720 = vsel %vm296, %v715, 0
  %v723 = vsel %vm296, %v716, 0
  %v726 = vsel %vm303, %v718, 0
  %728 = vmatpush.bf16.msra.mxu0 0
  %729 = vmatpush.bf16.msra.mxu0 0
  %730 = vmatpush.bf16.msra.mxu0 0
  %731 = vmatpush.bf16.msra.mxu0 0
  %732 = vmatpush.bf16.msra.mxu0 0
  %733 = vmatpush.bf16.msra.mxu0 0
  %734 = vmatpush.bf16.msra.mxu0 0
  %735 = vmatpush.bf16.msra.mxu0 %v726
  %736 = vmatmul.bf16.gmra.mxu0 %v720
  %v737 = vpop.f32.mrf.mxu0
  %v738 = vadd.f32 0.0, %v737
  %v739 = vpop.f32.mrf.mxu0
  %v740 = vadd.f32 0.0, %v739
  %741 = vmatmul.bf16.gmra.mxu0 %v723
  %v742 = vpop.f32.mrf.mxu0
  %v743 = vadd.f32 0.0, %v742
  %v744 = vpop.f32.mrf.mxu0
  %v745 = vadd.f32 0.0, %v744
  %746 = vdwg.mxu0
  %v747 = vadd.f32 %v706, %v738
  %v748 = vadd.f32 %v708, %v740
  %v749 = vadd.f32 %v711, %v743
  %v750 = vadd.f32 %v713, %v745
  %v751 = vld [vmem:[%s12] sm:$0x1]
  %v753 = vperm.slane %v751, 0
  %v755 = vadd.f32 %v747, %v753
  %v756 = vadd.f32 %v748, %v753
  %v757 = vadd.f32 %v749, %v753
  %v758 = vadd.f32 %v750, %v753
  %759 = vst.msk [vmem:[%s13] sm:$0xff] %vm159, %v755
  %760 = vst.msk [vmem:[%s13 + $0x8] sm:$0xff] %vm159, %v756
  %761 = vst.msk [vmem:[%s13 + $0x10] sm:$0xff] %vm159, %v757
  %762 = vst.msk [vmem:[%s13 + $0x18] sm:$0xff] %vm159, %v758
  // Predicated region
  $region54: #{tpu_custom_call.1} parent=0 // pred_check
    _
  $region55: #{tpu_custom_call.1} parent=0 // pred_check_branch
    %764 = sbr.rel (0) target = $region57
  $region56: #{tpu_custom_call.1} parent=0 // pred_region
    _
  $region57: #{tpu_custom_call.1} parent=0 // pred_fallthru
    _
  // Predicated region
  $region58: #{tpu_custom_call.1} parent=0 // pred_check
    _
  $region59: #{tpu_custom_call.1} parent=0 // pred_check_branch
    %766 = sbr.rel (0) target = $region61
  $region60: #{tpu_custom_call.1} parent=0 // pred_region
    _
  $region61: #{tpu_custom_call.1} parent=0 // pred_fallthru
    _

</llo_original>
